<compile_context>
chip_gen: v7x
topology: tpu7x:2x2x1
jax: 0.10.0
libtpu: 0.0.40
codegen_flags: <defaults>
</compile_context>

<pallas_src>
import functools
import math

import jax
import jax.numpy as jnp
from jax import lax
from jax.experimental import pallas as pl
from jax.experimental.pallas import tpu as pltpu


def _attn_conv_kernel(x_ref, w_ref, b_ref, o_ref, *, OC, W, tile_hw):
    """Fused: att = ReLU(1x1 conv(x)); out = att * (3x3 conv(x) + bias).

    x_ref: (C, tile_hw + 2W + 2)  row-flattened x tile with zero halo (MXU dtype)
    w_ref: (OC + 1, 9C)           rows 0..OC-1: 3x3 conv taps; row OC: attention 1x1
    b_ref: (OC, 1)                conv bias (f32)
    o_ref: (OC, tile_hw)          lane-dense output tile
    """
    halo = W + 1
    x = x_ref[...]                     # one load; tap extraction below is VMEM-only

    # Left/right column validity (padding=1 along W).  Vertical padding is real
    # zeros already present in the flattened slab, so no row masks are needed.
    col = lax.broadcasted_iota(jnp.int32, (1, tile_hw), 1) % W
    left_ok = col >= 1                 # reading the w-1 neighbour is valid
    right_ok = col <= W - 2            # reading the w+1 neighbour is valid

    taps = []
    for kh in range(3):
        for kw in range(3):
            off = halo + (kh - 1) * W + (kw - 1)       # static lane offset
            tap = x[:, off:off + tile_hw]              # (C, tile_hw)
            if kw == 0:
                tap = jnp.where(left_ok, tap, 0)
            elif kw == 2:
                tap = jnp.where(right_ok, tap, 0)
            taps.append(tap)
    patches = jnp.concatenate(taps, axis=0)            # (9C, tile_hw)

    acc = jnp.dot(w_ref[...], patches,
                  preferred_element_type=jnp.float32)  # (OC+1, tile_hw) f32 accum

    # TODO(synk): ReLUWithSparsity(beta=1e-5, rho=0.1) only adds a training-time
    # sparsity penalty; its forward pass is a plain ReLU.
    att = jnp.maximum(acc[OC:, :], 0.0)                # (1, tile_hw)
    conv = acc[:OC, :] + b_ref[...]                    # (OC, tile_hw), lane-bcast bias
    o_ref[...] = (att * conv).astype(o_ref.dtype)      # f32 elementwise, then cast


def _pick_tile_hw(H, W):
    """Lane tile: multiple of W (row-aligned halo) and of 128 (full, unmasked vst).

    Per-step VMEM ~ 2 * (C*(tile+2W+2) + OC*tile) * dtype_bytes (double-buffered);
    for large images/channels grow the tile toward ~512-1024 lanes but re-derive
    against v7x's 64 MiB VMEM (half of v5e/v6e).
    """
    hw = H * W
    lane = (W * 128) // math.gcd(W, 128)   # lcm(W, 128)
    return lane if hw % lane == 0 else hw


def attention_conv2d(x_nchw, w_att, w_conv, b_conv, *,
                     mxu_dtype=jnp.bfloat16, tile_hw=None):
    """PyTorch `Conv2d` module forward: ReLU(1x1 conv(x)) * (3x3 conv(x) + b).

    x_nchw: (N, C, H, W) f32
    w_att:  (1, C, 1, 1)  attention 1x1 conv weight (bias=False)
    w_conv: (OC, C, 3, 3) conv weight (OIHW), kernel_size=3, padding=1
    b_conv: (OC,)         conv bias
    returns (N, OC, H, W)
    """
    N, C, H, W = x_nchw.shape
    OC = w_conv.shape[0]
    HW = H * W
    if tile_hw is None:
        tile_hw = _pick_tile_hw(H, W)
    assert HW % tile_hw == 0 and tile_hw % W == 0
    T = HW // tile_hw
    halo = W + 1
    padded = tile_hw + 2 * halo

    # ---- glue: O(|x|) staging only (no 9x im2col in HBM, no transposes) ----
    # Row-flatten, zero-pad one image row (+1 corner element) each side, and stage
    # overlapping per-tile slabs so every grid step DMAs just its tile + halo and
    # all in-kernel tap slices stay static.  Overhead ~ (tile+2W+2)/tile of |x|.
    x_flat = x_nchw.reshape(N, C, HW).astype(mxu_dtype)
    x_flat = jnp.pad(x_flat, ((0, 0), (0, 0), (halo, halo)))       # (N, C, HW+2W+2)
    x_tiles = jnp.stack(
        [lax.slice_in_dim(x_flat, t * tile_hw, t * tile_hw + padded, axis=2)
         for t in range(T)], axis=1)                               # (N, T, C, padded)

    # Conv taps flattened in (kh, kw, c) order to match the in-kernel concat order;
    # the attention 1x1 weight is appended as one extra row on the centre tap.
    w_conv_flat = jnp.transpose(w_conv, (0, 2, 3, 1)).reshape(OC, 9 * C)
    w_att_row = jnp.zeros((1, 9 * C), w_conv_flat.dtype)
    w_att_row = w_att_row.at[0, 4 * C:5 * C].set(w_att.reshape(C))
    w_aug = jnp.concatenate([w_conv_flat, w_att_row], axis=0).astype(mxu_dtype)
    bias = b_conv.reshape(OC, 1).astype(jnp.float32)

    kernel = functools.partial(_attn_conv_kernel, OC=OC, W=W, tile_hw=tile_hw)

    out = pl.pallas_call(
        kernel,
        out_shape=jax.ShapeDtypeStruct((N, OC, HW), x_nchw.dtype),
        grid_spec=pltpu.PrefetchScalarGridSpec(
            num_scalar_prefetch=0,
            grid=(N, T),
            in_specs=[
                pl.BlockSpec((pl.Squeezed(), pl.Squeezed(), C, padded),
                             lambda n, t: (n, t, 0, 0)),
                pl.BlockSpec((OC + 1, 9 * C), lambda n, t: (0, 0)),   # resident
                pl.BlockSpec((OC, 1), lambda n, t: (0, 0)),           # resident
            ],
            out_specs=pl.BlockSpec((pl.Squeezed(), OC, tile_hw),
                                   lambda n, t: (n, 0, t)),
        ),
        compiler_params=pltpu.CompilerParams(
            dimension_semantics=("parallel", "parallel")),
    )(x_tiles, w_aug, bias)

    # (N, OC, HW) is already NCHW-ordered -> free reshape, no transpose.
    return out.reshape(N, OC, H, W)


def reference(x, w_att, w_conv, b_conv):
    """Pure-JAX NCHW reference mirroring the PyTorch module semantics."""
    att = lax.conv_general_dilated(
        x, w_att, window_strides=(1, 1), padding='VALID',
        dimension_numbers=('NCHW', 'OIHW', 'NCHW'))
    att = jnp.maximum(att, 0.0)
    conv = lax.conv_general_dilated(
        x, w_conv, window_strides=(1, 1), padding=((1, 1), (1, 1)),
        dimension_numbers=('NCHW', 'OIHW', 'NCHW'))
    conv = conv + b_conv[None, :, None, None]
    return att * conv


if __name__ == "__main__":
    key = jax.random.PRNGKey(0)
    k1, k2, k3, k4 = jax.random.split(key, 4)

    # Conv2d(in_channels=4, out_channels=8, kernel_size=3, padding=1)
    N, C, H, W, OC = 2, 4, 16, 16, 8
    x = jax.random.normal(k1, (N, C, H, W), jnp.float32)
    w_att = jax.random.normal(k2, (1, C, 1, 1), jnp.float32) * 0.5
    w_conv = jax.random.normal(k3, (OC, C, 3, 3), jnp.float32) * 0.2
    b_conv = jax.random.normal(k4, (OC,), jnp.float32) * 0.1

    ref = reference(x, w_att, w_conv, b_conv)

    # Exact-math path (f32 MXU inputs): tight tolerance.
    out_f32 = jax.block_until_ready(
        attention_conv2d(x, w_att, w_conv, b_conv, mxu_dtype=jnp.float32))
    assert out_f32.shape == (N, OC, H, W)
    assert jnp.allclose(out_f32, ref, atol=1e-4, rtol=1e-4), \
        float(jnp.max(jnp.abs(out_f32 - ref)))

    # Default fast path (bf16 MXU inputs, f32 accumulate): looser tolerance.
    out_bf16 = jax.block_until_ready(attention_conv2d(x, w_att, w_conv, b_conv))
    assert out_bf16.shape == (N, OC, H, W)
    assert jnp.allclose(out_bf16, ref, atol=5e-2, rtol=5e-2), \
        float(jnp.max(jnp.abs(out_bf16 - ref)))

    print("KERNEL_OK")
</pallas_src>

<mosaic_0001>
module attributes {stable_mosaic.version = 11 : i64} {
  func.func @_attn_conv_kernel(%arg0: i32, %arg1: i32, %arg2: memref<1x1x4x162xf32, #tpu.memory_space<vmem>>, %arg3: memref<9x36xf32, #tpu.memory_space<vmem>>, %arg4: memref<8x1xf32, #tpu.memory_space<vmem>>, %arg5: memref<1x8x128xf32, #tpu.memory_space<vmem>>) attributes {dimension_semantics = [#tpu.dimension_semantics<parallel>, #tpu.dimension_semantics<parallel>], iteration_bounds = array<i64: 2, 2>, scalar_prefetch = 0 : i64, scratch_operands = 0 : i64, tpu.core_type = #tpu.core_type<tc>, window_params = [{transform_indices = @transform_0, window_bounds = array<i64: 1, 1, 4, 162>}, {pipeline_mode = #tpu.pipeline_mode<synchronous>, transform_indices = @transform_1, window_bounds = array<i64: 9, 36>}, {pipeline_mode = #tpu.pipeline_mode<synchronous>, transform_indices = @transform_2, window_bounds = array<i64: 8, 1>}, {transform_indices = @transform_3, window_bounds = array<i64: 1, 8, 128>}]} {
    %c0 = arith.constant 0 : index
    %c0_0 = arith.constant 0 : index
    %c0_1 = arith.constant 0 : index
    %c0_2 = arith.constant 0 : index
    %0 = vector.load %arg2[%c0, %c0_0, %c0_1, %c0_2] : memref<1x1x4x162xf32, #tpu.memory_space<vmem>>, vector<1x1x4x162xf32>
    %1 = vector.shape_cast %0 : vector<1x1x4x162xf32> to vector<4x162xf32>
    %2 = tpu.iota {dimensions = array<i32: 1>} : vector<1x128xi32>
    %c16_i32 = arith.constant 16 : i32
    %c0_i32 = arith.constant 0 : i32
    %3 = arith.cmpi eq, %c16_i32, %c0_i32 : i32
    %c1_i32 = arith.constant 1 : i32
    %4 = arith.select %3, %c1_i32, %c16_i32 : i32
    %5 = vector.broadcast %4 : i32 to vector<1x128xi32>
    %6 = arith.remsi %2, %5 : vector<1x128xi32>
    %c0_i32_3 = arith.constant 0 : i32
    %7 = vector.broadcast %c0_i32_3 : i32 to vector<1x128xi32>
    %8 = arith.cmpi ne, %6, %7 : vector<1x128xi32>
    %c0_i32_4 = arith.constant 0 : i32
    %9 = vector.broadcast %c0_i32_4 : i32 to vector<1x128xi32>
    %10 = arith.cmpi slt, %6, %9 : vector<1x128xi32>
    %c0_i32_5 = arith.constant 0 : i32
    %11 = arith.cmpi slt, %4, %c0_i32_5 : i32
    %12 = vector.broadcast %11 : i1 to vector<1x128xi1>
    %13 = vector.broadcast %12 : vector<1x128xi1> to vector<1x128xi1>
    %14 = arith.xori %10, %13 : vector<1x128xi1>
    %15 = arith.andi %14, %8 : vector<1x128xi1>
    %16 = vector.broadcast %4 : i32 to vector<1x128xi32>
    %17 = arith.addi %6, %16 : vector<1x128xi32>
    %18 = arith.select %15, %17, %6 : vector<1x128xi1>, vector<1x128xi32>
    %c1_i32_6 = arith.constant 1 : i32
    %19 = vector.broadcast %c1_i32_6 : i32 to vector<1x128xi32>
    %20 = arith.cmpi sge, %18, %19 : vector<1x128xi32>
    %c14_i32 = arith.constant 14 : i32
    %21 = vector.broadcast %c14_i32 : i32 to vector<1x128xi32>
    %22 = arith.cmpi sle, %18, %21 : vector<1x128xi32>
    %23 = vector.extract_strided_slice %1 {offsets = [0, 0], sizes = [4, 128], strides = [1, 1]} : vector<4x162xf32> to vector<4x128xf32>
    %c0_i32_7 = arith.constant 0 : i32
    %24 = arith.sitofp %c0_i32_7 : i32 to f32
    %25 = vector.shape_cast %20 : vector<1x128xi1> to vector<1x128xi1>
    %26 = vector.broadcast %25 : vector<1x128xi1> to vector<4x128xi1>
    %27 = vector.broadcast %24 : f32 to vector<4x128xf32>
    %28 = arith.select %26, %23, %27 : vector<4x128xi1>, vector<4x128xf32>
    %29 = vector.extract_strided_slice %1 {offsets = [0, 1], sizes = [4, 128], strides = [1, 1]} : vector<4x162xf32> to vector<4x128xf32>
    %30 = vector.extract_strided_slice %1 {offsets = [0, 2], sizes = [4, 128], strides = [1, 1]} : vector<4x162xf32> to vector<4x128xf32>
    %c0_i32_8 = arith.constant 0 : i32
    %31 = arith.sitofp %c0_i32_8 : i32 to f32
    %32 = vector.shape_cast %22 : vector<1x128xi1> to vector<1x128xi1>
    %33 = vector.broadcast %32 : vector<1x128xi1> to vector<4x128xi1>
    %34 = vector.broadcast %31 : f32 to vector<4x128xf32>
    %35 = arith.select %33, %30, %34 : vector<4x128xi1>, vector<4x128xf32>
    %36 = vector.extract_strided_slice %1 {offsets = [0, 16], sizes = [4, 128], strides = [1, 1]} : vector<4x162xf32> to vector<4x128xf32>
    %c0_i32_9 = arith.constant 0 : i32
    %37 = arith.sitofp %c0_i32_9 : i32 to f32
    %38 = vector.shape_cast %20 : vector<1x128xi1> to vector<1x128xi1>
    %39 = vector.broadcast %38 : vector<1x128xi1> to vector<4x128xi1>
    %40 = vector.broadcast %37 : f32 to vector<4x128xf32>
    %41 = arith.select %39, %36, %40 : vector<4x128xi1>, vector<4x128xf32>
    %42 = vector.extract_strided_slice %1 {offsets = [0, 17], sizes = [4, 128], strides = [1, 1]} : vector<4x162xf32> to vector<4x128xf32>
    %43 = vector.extract_strided_slice %1 {offsets = [0, 18], sizes = [4, 128], strides = [1, 1]} : vector<4x162xf32> to vector<4x128xf32>
    %c0_i32_10 = arith.constant 0 : i32
    %44 = arith.sitofp %c0_i32_10 : i32 to f32
    %45 = vector.shape_cast %22 : vector<1x128xi1> to vector<1x128xi1>
    %46 = vector.broadcast %45 : vector<1x128xi1> to vector<4x128xi1>
    %47 = vector.broadcast %44 : f32 to vector<4x128xf32>
    %48 = arith.select %46, %43, %47 : vector<4x128xi1>, vector<4x128xf32>
    %49 = vector.extract_strided_slice %1 {offsets = [0, 32], sizes = [4, 128], strides = [1, 1]} : vector<4x162xf32> to vector<4x128xf32>
    %c0_i32_11 = arith.constant 0 : i32
    %50 = arith.sitofp %c0_i32_11 : i32 to f32
    %51 = vector.shape_cast %20 : vector<1x128xi1> to vector<1x128xi1>
    %52 = vector.broadcast %51 : vector<1x128xi1> to vector<4x128xi1>
    %53 = vector.broadcast %50 : f32 to vector<4x128xf32>
    %54 = arith.select %52, %49, %53 : vector<4x128xi1>, vector<4x128xf32>
    %55 = vector.extract_strided_slice %1 {offsets = [0, 33], sizes = [4, 128], strides = [1, 1]} : vector<4x162xf32> to vector<4x128xf32>
    %56 = vector.extract_strided_slice %1 {offsets = [0, 34], sizes = [4, 128], strides = [1, 1]} : vector<4x162xf32> to vector<4x128xf32>
    %c0_i32_12 = arith.constant 0 : i32
    %57 = arith.sitofp %c0_i32_12 : i32 to f32
    %58 = vector.shape_cast %22 : vector<1x128xi1> to vector<1x128xi1>
    %59 = vector.broadcast %58 : vector<1x128xi1> to vector<4x128xi1>
    %60 = vector.broadcast %57 : f32 to vector<4x128xf32>
    %61 = arith.select %59, %56, %60 : vector<4x128xi1>, vector<4x128xf32>
    %62 = tpu.concatenate %28, %29, %35, %41, %42, %48, %54, %55, %61 in 0 : vector<4x128xf32>, vector<4x128xf32>, vector<4x128xf32>, vector<4x128xf32>, vector<4x128xf32>, vector<4x128xf32>, vector<4x128xf32>, vector<4x128xf32>, vector<4x128xf32> -> vector<36x128xf32>
    %c0_13 = arith.constant 0 : index
    %c0_14 = arith.constant 0 : index
    %63 = vector.load %arg3[%c0_13, %c0_14] : memref<9x36xf32, #tpu.memory_space<vmem>>, vector<9x36xf32>
    %cst = arith.constant dense<0.000000e+00> : vector<9x128xf32>
    %64 = tpu.matmul %63, %62, %cst {dimension_numbers = #tpu.dot_dimension_numbers<[1], [0], [0], [1], [0, 0, 1, 1], [], []>} : vector<9x36xf32>, vector<36x128xf32>, vector<9x128xf32> -> vector<9x128xf32>
    %65 = vector.extract_strided_slice %64 {offsets = [8, 0], sizes = [1, 128], strides = [1, 1]} : vector<9x128xf32> to vector<1x128xf32>
    %cst_15 = arith.constant 0.000000e+00 : f32
    %66 = vector.broadcast %cst_15 : f32 to vector<1x128xf32>
    %67 = arith.maximumf %65, %66 : vector<1x128xf32>
    %68 = vector.extract_strided_slice %64 {offsets = [0, 0], sizes = [8, 128], strides = [1, 1]} : vector<9x128xf32> to vector<8x128xf32>
    %c0_16 = arith.constant 0 : index
    %c0_17 = arith.constant 0 : index
    %69 = vector.load %arg4[%c0_16, %c0_17] : memref<8x1xf32, #tpu.memory_space<vmem>>, vector<8x1xf32>
    %70 = vector.broadcast %69 : vector<8x1xf32> to vector<8x128xf32>
    %71 = arith.addf %68, %70 : vector<8x128xf32>
    %72 = vector.broadcast %67 : vector<1x128xf32> to vector<8x128xf32>
    %73 = arith.mulf %72, %71 : vector<8x128xf32>
    %c0_18 = arith.constant 0 : index
    %c0_19 = arith.constant 0 : index
    %c0_20 = arith.constant 0 : index
    %74 = vector.load %arg5[%c0_18, %c0_19, %c0_20] : memref<1x8x128xf32, #tpu.memory_space<vmem>>, vector<1x8x128xf32>
    %75 = vector.shape_cast %74 : vector<1x8x128xf32> to vector<8x128xf32>
    %76 = vector.shape_cast %73 : vector<8x128xf32> to vector<1x8x128xf32>
    tpu.vector_store %arg5[%c0_18, %c0_19, %c0_20], %76 {strides = array<i32>} : memref<1x8x128xf32, #tpu.memory_space<vmem>>, vector<1x8x128xf32>,
    return
  }
  func.func @transform_0(%arg0: i32, %arg1: i32) -> (i32, i32, i32, i32) {
    %c0_i32 = arith.constant 0 : i32
    %c0_i32_0 = arith.constant 0 : i32
    %c0_i32_1 = arith.constant 0 : i32
    return %arg0, %arg1, %c0_i32, %c0_i32_0 : i32, i32, i32, i32
  }
  func.func @transform_1(%arg0: i32, %arg1: i32) -> (i32, i32) {
    %c0_i32 = arith.constant 0 : i32
    %c0_i32_0 = arith.constant 0 : i32
    %c0_i32_1 = arith.constant 0 : i32
    return %c0_i32, %c0_i32_0 : i32, i32
  }
  func.func @transform_2(%arg0: i32, %arg1: i32) -> (i32, i32) {
    %c0_i32 = arith.constant 0 : i32
    %c0_i32_0 = arith.constant 0 : i32
    %c0_i32_1 = arith.constant 0 : i32
    return %c0_i32, %c0_i32_0 : i32, i32
  }
  func.func @transform_3(%arg0: i32, %arg1: i32) -> (i32, i32, i32) {
    %c0_i32 = arith.constant 0 : i32
    %c0_i32_0 = arith.constant 0 : i32
    return %arg0, %c0_i32, %arg1 : i32, i32, i32
  }
}

</mosaic_0001>

<llo_original>
// kernel: tpu_custom_call.1
$region0: #{tpu_custom_call.1}
  #allocation0 [shape = 'u32[]', space=smem, size = 0x4, offset = 0x4, fixed_abs, tag = 'smem constant byte address 0x4 - core index']
  #allocation1 [shape = 'u32[144,128]{1,0:T(1,128)}', space=vmem, size = 0x12000, scoped, tag = 'internal scratch']
  %s0 = inlined_call_operand.hbm [shape: f32[2,2,4,162], index: 0, kind: input, shape index: {}]
  %s1 = inlined_call_operand.hbm [shape: f32[9,36], index: 1, kind: input, shape index: {}]
  %s2 = inlined_call_operand.vmem [shape: f32[8,1], index: 2, kind: input, shape index: {}]
  %s3 = inlined_call_operand.hbm [shape: f32[2,8,256], index: 3, kind: output, shape index: {}]
  %s4 = sld [smem:[#allocation0]]
  $region53: #{tpu_custom_call.1} parent=0
    _
  %s6 = ssub.s32 1, %s4
  %s7 = scalar_select 0, %s6, %s4
  $region1: #{tpu_custom_call.1} parent=0
    #allocation2 [shape = 'u8[8192]{0}', space=vmem, size = 0x2000, scoped, tag = 'input window, operand 0']
    #allocation3 [shape = 's32[2]{0}', space=sflag, size = 0x8, scoped, tag = 'scoped memory for tpu_custom_call.1']
    #allocation4 [shape = 's32[2]{0}', space=sflag, size = 0x8, scoped, tag = 'scoped memory for tpu_custom_call.1']
    #allocation5 [shape = 'u8[8192]{0}', space=vmem, size = 0x2000, scoped, tag = 'input window, operand 1, single buffered']
    #allocation6 [shape = 's32[1]{0}', space=sflag, size = 0x4, scoped, tag = 'scoped memory for tpu_custom_call.1']
    #allocation7 [shape = 'u8[8192]{0}', space=vmem, size = 0x2000, scoped, tag = 'output window, operand 0']
    %8 = vsyncpa [#allocation3], 0
    %s9 = scalar_lea.sflag [#allocation3], 1
    %10 = vsyncpa %s9, 0
    %11 = vsyncpa [#allocation6], 0
    %12 = vsyncpa [#allocation4], 0
    %s13 = scalar_lea.sflag [#allocation4], 1
    %14 = vsyncpa %s13, 0
    loop: start=0, step=1, limit=6
    $region2: #{tpu_custom_call.1} parent=1 // loop_pre_header
      _
    $region3: #{tpu_custom_call.1} parent=1 // loop_header
      %s16 = sphi 0, %s20
      %p17 = scmp.ge.s32.totalorder %s16, 6
      %s23 = sphi 0, %s35
      %s24 = sphi 0, %s31
      %s25 = sphi 0, %s23
      %s26 = sphi 0, %s24
      %s27 = sphi 0, %s25
      %s28 = sphi 0, %s26
      %s40 = sphi 0, %s42
      %s43 = sphi 0, %s40
      %s44 = sphi 0, %s43
      %s60 = sphi 0, %s44
      %s64 = sphi 0, %s64
      %s66 = sphi 0, %s64
      %s67 = sphi 0, %s66
      %s81 = sphi 0, %s67
      %s85 = sphi 0, %s85
      %s87 = sphi 0, %s85
      %s88 = sphi 0, %s87
      %s102 = sphi 0, %s88
      %s110 = sphi 0, %s112
      %s113 = sphi 0, %s110
      %s114 = sphi 0, %s113
      %s130 = sphi 0, %s114
    $region4: #{tpu_custom_call.1} parent=1 // loop_header_branch
      %19 = sbr.rel (%p17) target = $region8
    $region5: #{tpu_custom_call.1} parent=1 // loop_body
      %s21 = ssub.s32 %s16, 1
      %s22 = ssub.s32 %s16, 2
      %s29 = sadd.s32 1, %s24
      %p30 = scmp.ge.s32.totalorder %s29, 2
      %s31 = scalar_select %p30, 0, %s29
      %s32 = sadd.s32 1, %s23
      %s33 = scalar_select %p30, %s32, %s23
      %p34 = scmp.ge.s32.totalorder %s33, 2
      %s35 = scalar_select %p34, 0, %s33
      %s36 = ssub.s32 %s23, %s35
      %s37 = ssub.s32 %s24, %s31
      %s38 = sor.u32 %s36, %s37
      %p39 = scmp.eq.s32.totalorder %s38, 0
      %s41 = sadd.s32 %s40, 1
      %s42 = scalar_select %p39, %s40, %s41
      %p45 = pneg %p39
      %p46 = scmp.eq.s32.totalorder %s16, 3
      %p47 = por %p45, %p46
      %p48 = scmp.ne.s32.totalorder %s40, %s43
      %p49 = scmp.eq.s32.totalorder %s16, 0
      %p50 = por %p48, %p49
      %p51 = scmp.ne.s32.totalorder %s40, %s43
      %p52 = scmp.eq.s32.totalorder %s21, 3
      %p53 = por %p51, %p52
      %p54 = scmp.ne.s32.totalorder %s43, %s44
      %p55 = scmp.eq.s32.totalorder %s21, 0
      %p56 = por %p54, %p55
      %p57 = scmp.ne.s32.totalorder %s43, %s44
      %p58 = scmp.eq.s32.totalorder %s22, 3
      %p59 = por %p57, %p58
      %p61 = scmp.ne.s32.totalorder %s44, %s60
      %p62 = scmp.eq.s32.totalorder %s22, 0
      %p63 = por %p61, %p62
      %s65 = sadd.s32 %s64, 1
      %p68 = scmp.eq.s32.totalorder %s16, 3
      %p69 = scmp.ne.s32.totalorder %s64, %s66
      %p70 = scmp.eq.s32.totalorder %s16, 0
      %p71 = por %p69, %p70
      %p72 = scmp.ne.s32.totalorder %s64, %s66
      %p73 = scmp.eq.s32.totalorder %s21, 3
      %p74 = por %p72, %p73
      %p75 = scmp.ne.s32.totalorder %s66, %s67
      %p76 = scmp.eq.s32.totalorder %s21, 0
      %p77 = por %p75, %p76
      %p78 = scmp.ne.s32.totalorder %s66, %s67
      %p79 = scmp.eq.s32.totalorder %s22, 3
      %p80 = por %p78, %p79
      %p82 = scmp.ne.s32.totalorder %s67, %s81
      %p83 = scmp.eq.s32.totalorder %s22, 0
      %p84 = por %p82, %p83
      %s86 = sadd.s32 %s85, 1
      %p89 = scmp.eq.s32.totalorder %s16, 3
      %p90 = scmp.ne.s32.totalorder %s85, %s87
      %p91 = scmp.eq.s32.totalorder %s16, 0
      %p92 = por %p90, %p91
      %p93 = scmp.ne.s32.totalorder %s85, %s87
      %p94 = scmp.eq.s32.totalorder %s21, 3
      %p95 = por %p93, %p94
      %p96 = scmp.ne.s32.totalorder %s87, %s88
      %p97 = scmp.eq.s32.totalorder %s21, 0
      %p98 = por %p96, %p97
      %p99 = scmp.ne.s32.totalorder %s87, %s88
      %p100 = scmp.eq.s32.totalorder %s22, 3
      %p101 = por %p99, %p100
      %p103 = scmp.ne.s32.totalorder %s88, %s102
      %p104 = scmp.eq.s32.totalorder %s22, 0
      %p105 = por %p103, %p104
      %s106 = ssub.s32 %s23, %s35
      %s107 = ssub.s32 %s24, %s31
      %s108 = sor.u32 %s106, %s107
      %p109 = scmp.eq.s32.totalorder %s108, 0
      %s111 = sadd.s32 %s110, 1
      %s112 = scalar_select %p109, %s110, %s111
      %p115 = pneg %p109
      %p116 = scmp.eq.s32.totalorder %s16, 3
      %p117 = por %p115, %p116
      %p118 = scmp.ne.s32.totalorder %s110, %s113
      %p119 = scmp.eq.s32.totalorder %s16, 0
      %p120 = por %p118, %p119
      %p121 = scmp.ne.s32.totalorder %s110, %s113
      %p122 = scmp.eq.s32.totalorder %s21, 3
      %p123 = por %p121, %p122
      %p124 = scmp.ne.s32.totalorder %s113, %s114
      %p125 = scmp.eq.s32.totalorder %s21, 0
      %p126 = por %p124, %p125
      %p127 = scmp.ne.s32.totalorder %s113, %s114
      %p128 = scmp.eq.s32.totalorder %s22, 3
      %p129 = por %p127, %p128
      %p131 = scmp.ne.s32.totalorder %s114, %s130
      %p132 = scmp.eq.s32.totalorder %s22, 0
      %p133 = por %p131, %p132
      %p134 = scmp.le.s32.totalorder 1, %s16
      %p135 = scmp.lt.s32.totalorder %s16, 5
      %p136 = pnand %p134, %p135
      %p137 = pneg %p136
      // Predicated region
      $region9: #{tpu_custom_call.1} parent=5 // pred_check
        _
      $region10: #{tpu_custom_call.1} parent=5 // pred_check_branch
        %139 = sbr.rel (%p136) target = $region12
      $region11: #{tpu_custom_call.1} parent=5 // pred_region
        %s140 = ssub.s32 %s16, 1
        // Predicated region
        $region13: #{tpu_custom_call.1} parent=11 // pred_check
          %p141 = pneg %p77
        $region14: #{tpu_custom_call.1} parent=11 // pred_check_branch
          %143 = sbr.rel (%p141) target = $region16
        $region15: #{tpu_custom_call.1} parent=11 // pred_region
          %s145 = ssub.s32 256, 256
          %146 = vsyncadd [#allocation6], %s145
          %s147 = sshll.u32 [#allocation5], 4
          %s148 = int_to_ptr.vmem [resolvable:$true] %s147
          %153 = dma.hbm_to_vmem [thread:$0]  %s1, 256, %s148, [#allocation6], 128, 128, 8
        $region16: #{tpu_custom_call.1} parent=11 // pred_fallthru
          _
        // Predicated region
        $region17: #{tpu_custom_call.1} parent=11 // pred_check
          %p154 = pneg %p98
        $region18: #{tpu_custom_call.1} parent=11 // pred_check_branch
          %156 = sbr.rel (%p154) target = $region20
        $region19: #{tpu_custom_call.1} parent=11 // pred_region
          _
        $region20: #{tpu_custom_call.1} parent=11 // pred_fallthru
          _
      $region12: #{tpu_custom_call.1} parent=5 // pred_fallthru
        _
      %p157 = scmp.lt.s32.totalorder %s16, 4
      // Predicated region
      $region21: #{tpu_custom_call.1} parent=5 // pred_check
        %p158 = pneg %p157
      $region22: #{tpu_custom_call.1} parent=5 // pred_check_branch
        %160 = sbr.rel (%p158) target = $region24
      $region23: #{tpu_custom_call.1} parent=5 // pred_region
        // Predicated region
        $region25: #{tpu_custom_call.1} parent=23 // pred_check
          %p161 = pneg %p50
        $region26: #{tpu_custom_call.1} parent=23 // pred_check_branch
          %163 = sbr.rel (%p161) target = $region28
        $region27: #{tpu_custom_call.1} parent=23 // pred_region
          %s164 = sand.u32 %s40, 1
          %s165 = scalar_lea.sflag [#allocation3], %s164
          %s166 = sand.u32 %s40, 1
          %s167 = smul.addr %s166, 8
          %s168 = scalar_lea.vmem [#allocation2], %s167
          %s170 = ssub.s32 128, 128
          %171 = vsyncadd %s165, %s170
          %s172 = smul.addr %s24, 2
          %s173 = smul.addr %s23, 4
          %s174 = sadd.s32 %s172, %s173
          %s175 = smul.addr %s174, 64
          %s176 = scalar_lea.hbm %s0, %s175
          %s178 = sshll.u32 %s168, 4
          %s179 = int_to_ptr.vmem [resolvable:$true] %s178
          %181 = dma.hbm_to_vmem [thread:$0]  %s176, 128, %s179, %s165
        $region28: #{tpu_custom_call.1} parent=23 // pred_fallthru
          _
      $region24: #{tpu_custom_call.1} parent=5 // pred_fallthru
        _
      %p182 = scmp.le.s32.totalorder 1, %s16
      %p183 = scmp.lt.s32.totalorder %s16, 5
      %p184 = pnand %p182, %p183
      %p185 = pneg %p184
      // Predicated region
      $region29: #{tpu_custom_call.1} parent=5 // pred_check
        _
      $region30: #{tpu_custom_call.1} parent=5 // pred_check_branch
        %187 = sbr.rel (%p184) target = $region32
      $region31: #{tpu_custom_call.1} parent=5 // pred_region
        %s188 = ssub.s32 %s16, 1
        %s189 = sand.u32 %s43, 1
        %s190 = scalar_lea.sflag [#allocation3], %s189
        %s191 = sand.u32 %s43, 1
        %s192 = smul.addr %s191, 8
        %s193 = scalar_lea.vmem [#allocation2], %s192
        // Predicated region
        $region33: #{tpu_custom_call.1} parent=31 // pred_check
          %p194 = pneg %p56
        $region34: #{tpu_custom_call.1} parent=31 // pred_check_branch
          %196 = sbr.rel (%p194) target = $region36
        $region35: #{tpu_custom_call.1} parent=31 // pred_region
          %197 = dma.done %s190, 128
        $region36: #{tpu_custom_call.1} parent=31 // pred_fallthru
          _
        // Predicated region
        $region37: #{tpu_custom_call.1} parent=31 // pred_check
          %p198 = pneg %p77
        $region38: #{tpu_custom_call.1} parent=31 // pred_check_branch
          %200 = sbr.rel (%p198) target = $region40
        $region39: #{tpu_custom_call.1} parent=31 // pred_region
          %201 = dma.done [#allocation6], 256
        $region40: #{tpu_custom_call.1} parent=31 // pred_fallthru
          _
        %s202 = sand.u32 %s43, 1
        %s203 = scalar_lea.sflag [#allocation3], %s202
        %s204 = sand.u32 %s43, 1
        %s205 = smul.addr %s204, 8
        %s206 = scalar_lea.vmem [#allocation2], %s205
        %p207 = pneg %p56
        %p208 = pneg %p53
        %p209 = pneg %p77
        %p210 = pneg %p74
        %p211 = pneg %p98
        %p212 = pneg %p95
        %p213 = pneg %p126
        %p214 = pneg %p123
        %s215 = sand.u32 %s113, 1
        %s216 = scalar_lea.sflag [#allocation4], %s215
        %s217 = sand.u32 %s113, 1
        %s218 = smul.addr %s217, 8
        %s219 = scalar_lea.vmem [#allocation7], %s218
        %v220 = vld [vmem:[%s193] sm:$0xff]
        %v221 = vlaneseq
        %v222 = vand.u32 %v221, 127
        %vm223 = vcmp.lt.s32.totalorder %v222, 0
        %v224 = vsub.s32 0, %v222
        %v225 = vsel %vm223, %v224, %v222
        %v226 = vshrl.u32 %v225, 4
        %v227 = vand.u32 %v225, 15
        %v228 = vsub.s32 0, %v227
        %v229 = vsel %vm223, %v228, %v227
        %vm230 = vcmp.ne.s32.totalorder %v229, 0
        %vm231 = vcmp.lt.s32.totalorder %v229, 0
        %vm232 = vmand %vm231, %vm230
        %v233 = vadd.s32 %v229, 16
        %v234 = vsel %vm232, %v233, %v229
        %vm235 = vcmp.ge.s32.totalorder %v234, 1
        %vm236 = vcmp.le.s32.totalorder %v234, 14
        %v237 = vsel %vm235, 1, 0
        %vm238 = vcmp.eq.s32.totalorder %v237, 1
        %v239 = vsel %vm238, %v220, 0.0
        %v240 = vsel %vm236, 1, 0
        %vm241 = vcmp.eq.s32.totalorder %v240, 1
        %v243 = vcombine.high %v220, %v220
        %244 = vrot.lane.b32.xlu0 %v220, 126
        %v245 = vpop.permute.xlu0 %244
        %246 = vrot.lane.b32.xlu0 %v243, 126
        %v247 = vpop.permute.xlu0 %246
        %vm248 = vcmask 1031168
        %v249 = vsel %vm248, %v245, %v247
        %v251 = vsel %vm241, %v249, 0.0
        %252 = vrot.lane.b32.xlu0 %v220, 112
        %v253 = vpop.permute.xlu0 %252
        %254 = vrot.lane.b32.xlu0 %v243, 112
        %v255 = vpop.permute.xlu0 %254
        %vm256 = vcmask 916480
        %v257 = vsel %vm256, %v253, %v255
        %v259 = vsel %vm238, %v257, 0.0
        %260 = vrot.lane.b32.xlu0 %v220, 110
        %v261 = vpop.permute.xlu0 %260
        %262 = vrot.lane.b32.xlu0 %v243, 110
        %v263 = vpop.permute.xlu0 %262
        %vm264 = vcmask 900096
        %v265 = vsel %vm264, %v261, %v263
        %v267 = vsel %vm241, %v265, 0.0
        %268 = vrot.lane.b32.xlu0 %v220, 96
        %v269 = vpop.permute.xlu0 %268
        %270 = vrot.lane.b32.xlu0 %v243, 96
        %v271 = vpop.permute.xlu0 %270
        %vm272 = vcmask 785408
        %v273 = vsel %vm272, %v269, %v271
        %v275 = vsel %vm238, %v273, 0.0
        %276 = vrot.lane.b32.xlu0 %v220, 94
        %v277 = vpop.permute.xlu0 %276
        %278 = vrot.lane.b32.xlu0 %v243, 94
        %v279 = vpop.permute.xlu0 %278
        %vm280 = vcmask 769024
        %v281 = vsel %vm280, %v277, %v279
        %v283 = vsel %vm241, %v281, 0.0
        %v284 = vcombine.low %v220, %v220
        %285 = vrot.lane.b32.xlu0 %v284, 127
        %v286 = vpop.permute.xlu0 %285
        %287 = vrot.lane.b32.xlu0 %v220, 127
        %v288 = vpop.permute.xlu0 %287
        %vm289 = vcmask 1039360
        %v290 = vsel %vm289, %v286, %v288
        %v293 = vrot.slane %v259, 4
        %295 = vrot.lane.b32.xlu0 %v220, 111
        %v296 = vpop.permute.xlu0 %295
        %297 = vrot.lane.b32.xlu0 %v243, 111
        %v298 = vpop.permute.xlu0 %297
        %vm299 = vcmask 908288
        %v300 = vsel %vm299, %v296, %v298
        %v303 = vrot.slane %v267, 4
        %305 = vrot.lane.b32.xlu0 %v284, 95
        %v306 = vpop.permute.xlu0 %305
        %307 = vrot.lane.b32.xlu0 %v220, 95
        %v308 = vpop.permute.xlu0 %307
        %vm309 = vcmask 777216
        %v310 = vsel %vm309, %v306, %v308
        %vm312 = vcmask 1043456
        %v313 = vsel %vm312, %v239, %v290
        %v314 = vsel %vm312, %v251, %v293
        %v315 = vsel %vm312, %v300, %v303
        %v316 = vsel %vm312, %v275, %v310
        %v317 = vld [vmem:[#allocation5] sm:$0xff]
        %v318 = vld [vmem:[#allocation5 + $0x8] sm:$0x1]
        %vm319 = vcmask 293888
        %v321 = vsel %vm319, %v317, 0
        %v324 = vsel %vm319, %v318, 0
        %v327 = vsel %vm312, %v283, 0
        %329 = vmatprep.subr.mxu0 0.0
        %330 = vmatpush1.msra.mxu0 %v313
        %331 = vmatprep.subr.mxu0 0.0
        %332 = vmatpush1.msra.mxu0 %v314
        %333 = vmatprep.subr.mxu0 0.0
        %334 = vmatpush1.msra.mxu0 %v315
        %335 = vmatprep.subr.mxu0 0.0
        %336 = vmatpush1.msra.mxu0 %v316
        %337 = vmatprep.subr.mxu0 0.0
        %338 = vmatpush1.msra.mxu0 %v327
        %339 = vmatprep.subr.mxu0 0.0
        %340 = vmatpush1.msra.mxu0 0.0
        %341 = vmatprep.subr.mxu0 0.0
        %342 = vmatpush1.msra.mxu0 0.0
        %343 = vmatprep.subr.mxu0 0.0
        %344 = vmatpush1.msra.mxu0 0.0
        %345 = vmatprep.subr.mxu0 0.0
        %346 = vmatpush1.msra.mxu0 0.0
        %347 = vmatprep.subr.mxu0 0.0
        %348 = vmatpush1.msra.mxu0 0.0
        %349 = vmatprep.subr.mxu0 0.0
        %350 = vmatpush1.msra.mxu0 0.0
        %351 = vmatprep.subr.mxu0 0.0
        %352 = vmatpush1.msra.mxu0 0.0
        %353 = vmatprep.subr.mxu0 0.0
        %354 = vmatpush1.msra.mxu0 0.0
        %355 = vmatprep.subr.mxu0 0.0
        %356 = vmatpush1.msra.mxu0 0.0
        %357 = vmatprep.subr.mxu0 0.0
        %358 = vmatpush1.msra.mxu0 0.0
        %359 = vmatprep.subr.mxu0 0.0
        %360 = vmatpush1.msra.mxu0 0.0
        %361 = vmatprep.subr.mxu0 0.0
        %362 = vmatpush1.msra.mxu0 0.0
        %363 = vmatprep.subr.mxu0 0.0
        %364 = vmatpush1.msra.mxu0 0.0
        %365 = vmatprep.subr.mxu0 0.0
        %366 = vmatpush1.msra.mxu0 0.0
        %367 = vmatprep.subr.mxu0 0.0
        %368 = vmatpush1.msra.mxu0 0.0
        %369 = vmatprep.subr.mxu0 0.0
        %370 = vmatpush1.msra.mxu0 0.0
        %371 = vmatprep.subr.mxu0 0.0
        %372 = vmatpush1.msra.mxu0 0.0
        %373 = vmatprep.subr.mxu0 0.0
        %374 = vmatpush1.msra.mxu0 0.0
        %375 = vmatprep.subr.mxu0 0.0
        %376 = vmatpush1.msra.mxu0 0.0
        %377 = vmatprep.subr.mxu0 0.0
        %378 = vmatpush1.msra.mxu0 0.0
        %379 = vmatprep.subr.mxu0 0.0
        %380 = vmatpush1.msra.mxu0 0.0
        %381 = vmatprep.subr.mxu0 0.0
        %382 = vmatpush1.msra.mxu0 0.0
        %383 = vmatprep.subr.mxu0 0.0
        %384 = vmatpush1.msra.mxu0 0.0
        %385 = vmatprep.subr.mxu0 0.0
        %386 = vmatpush1.msra.mxu0 0.0
        %387 = vmatprep.subr.mxu0 0.0
        %388 = vmatpush1.msra.mxu0 0.0
        %389 = vmatprep.subr.mxu0 0.0
        %390 = vmatpush1.msra.mxu0 0.0
        %391 = vmatprep.subr.mxu0 0.0
        %392 = vmatpush1.msra.mxu0 0.0
        %393 = vmatprep.mubr.f32.mxu0 0.0
        %394 = vmatmul.mubr.f32.gmra.mrb[0].mxu0 %v321
        %v395 = vpop.f32.mrb[0].mxu0
        %v396 = vadd.f32 0.0, %v395
        %v397 = vpop.f32.mrb[0].mxu0
        %398 = vmatprep.mubr.f32.mxu0 0.0
        %399 = vmatmul.mubr.f32.gmra.mrb[0].mxu0 %v324
        %v400 = vpop.f32.mrb[0].mxu0
        %v401 = vadd.f32 0.0, %v400
        %v402 = vpop.f32.mrb[0].mxu0
        %403 = vdwg.mxu0
        %v404 = vmax.f32 %v401, 0.0
        %v405 = vld [vmem:[%s2] sm:$0xff]
        %407 = vset.pattern.permute.xlu0 0
        %408 = vperm.xlu0 %407, %v405
        %v409 = vpop.permute.xlu0 %408
        %v411 = vadd.f32 %v396, %v409
        %v412 = vlaneseq
        %v413 = vshrl.u32 %v412, 7
        %v414 = vsub.s32 0, %v413
        %v415 = vrot.slane %v404, %v414
        %v416 = vmul.f32 %v415, %v411
        %417 = vst [vmem:[%s219] sm:$0xff] %v416
        %s418 = sand.u32 %s113, 1
        %s419 = scalar_lea.sflag [#allocation4], %s418
        %s420 = sand.u32 %s113, 1
        %s421 = smul.addr %s420, 8
        %s422 = scalar_lea.vmem [#allocation7], %s421
        // Predicated region
        $region41: #{tpu_custom_call.1} parent=31 // pred_check
          %p423 = pneg %p123
        $region42: #{tpu_custom_call.1} parent=31 // pred_check_branch
          %425 = sbr.rel (%p423) target = $region44
        $region43: #{tpu_custom_call.1} parent=31 // pred_region
          %s427 = ssub.s32 128, 128
          %428 = vsyncadd %s419, %s427
          %s429 = smul.addr %s25, 2
          %s430 = sadd.s32 %s26, %s429
          %s431 = smul.addr %s430, 128
          %s432 = scalar_lea.hbm %s3, %s431
          %s434 = sshll.u32 %s422, 4
          %s435 = int_to_ptr.vmem [resolvable:$true] %s434
          %437 = dma.vmem_to_hbm [thread:$0]  %s435, 128, %s432, %s419
        $region44: #{tpu_custom_call.1} parent=31 // pred_fallthru
          _
      $region32: #{tpu_custom_call.1} parent=5 // pred_fallthru
        _
      %p438 = scmp.le.s32.totalorder 2, %s16
      // Predicated region
      $region45: #{tpu_custom_call.1} parent=5 // pred_check
        %p439 = pneg %p438
      $region46: #{tpu_custom_call.1} parent=5 // pred_check_branch
        %441 = sbr.rel (%p439) target = $region48
      $region47: #{tpu_custom_call.1} parent=5 // pred_region
        %s442 = ssub.s32 %s16, 2
        // Predicated region
        $region49: #{tpu_custom_call.1} parent=47 // pred_check
          %p443 = pneg %p129
        $region50: #{tpu_custom_call.1} parent=47 // pred_check_branch
          %445 = sbr.rel (%p443) target = $region52
        $region51: #{tpu_custom_call.1} parent=47 // pred_region
          %s446 = sand.u32 %s114, 1
          %s447 = scalar_lea.sflag [#allocation4], %s446
          %s448 = sand.u32 %s114, 1
          %s449 = smul.addr %s448, 8
          %s450 = scalar_lea.vmem [#allocation7], %s449
          %451 = dma.done %s447, 128
        $region52: #{tpu_custom_call.1} parent=47 // pred_fallthru
          _
      $region48: #{tpu_custom_call.1} parent=5 // pred_fallthru
        _
    $region6: #{tpu_custom_call.1} parent=1 // loop_footer
      %s20 = sadd.s32 1, %s16
    $region7: #{tpu_custom_call.1} parent=1 // loop_footer_branch
      %15 = sbr.rel target = $region3
    $region8: #{tpu_custom_call.1} parent=1 // loop_exit
      _
    %452 = vsyncpa [#allocation3], 1
    %s453 = scalar_lea.sflag [#allocation3], 1
    %454 = vsyncpa %s453, 1
    %455 = vsyncpa [#allocation6], 1
    %456 = vsyncpa [#allocation4], 1
    %s457 = scalar_lea.sflag [#allocation4], 1
    %458 = vsyncpa %s457, 1

</llo_original>
